<compile_context>
chip_gen: v5e
topology: v5e:2x2
jax: 0.10.0
libtpu: 0.0.40
codegen_flags: <defaults>
</compile_context>

<pallas_src>
import jax
import jax.numpy as jnp
from jax.experimental import pallas as pl
from jax.experimental.pallas import tpu as pltpu


def gated_conv_kernel(p_ref, w_ref, b_ref, o_ref):
    """p: (K, tm), w: (2*Cout, K), b: (2*Cout, 1) f32, o: (Cout, tm)."""
    cout = o_ref.shape[0]
    # One fused MXU matmul for both halves, f32 accumulation.
    y = jnp.dot(w_ref[...], p_ref[...], preferred_element_type=jnp.float32)
    y = y + b_ref[...]                                 # bias broadcast along lanes (f32)
    xh = y[:cout, :]                                   # Identity half
    mh = y[cout:, :]                                   # gate half
    hs = jnp.clip(mh * (1.0 / 6.0) + 0.5, 0.0, 1.0)    # Hardsigmoid, multiply not divide
    o_ref[...] = (xh * hs).astype(o_ref.dtype)


def _pick_spatial_tile(ohw, k, c2, n, in_itemsize):
    """Lane tile over OH*OW.

    * small maps: one full-dim block (allowed even if not 128-aligned), but when N==1
      force >= 2 spatial blocks so both v7x TensorCores (and the pipeline) get work.
    * large maps: multiple of 128, capped at 1024, sized so the double-buffered
      patch + output columns stay well inside a conservative (v7x-safe) VMEM budget.
    """
    if ohw <= 128:
        return ohw
    if ohw <= 512:
        if n >= 2:
            return ohw
        return ((ohw + 1) // 2 + 127) // 128 * 128
    budget = 8 << 20
    per_col = 2 * (k * in_itemsize + c2 * 4 + (c2 // 2) * 4)  # dbl-buffered in/out cols
    tm = (budget // per_col) // 128 * 128
    return int(max(128, min(1024, tm)))


def gated_conv2d(x, weight, bias, *, compute_dtype=jnp.bfloat16, out_dtype=jnp.float32):
    """x: (N, Cin, H, W); weight: (2*Cout, Cin, KH, KW); bias: (2*Cout,).

    Returns (N, Cout, OH, OW) with stride=1, padding=0 (nn.Conv2d defaults).
    compute_dtype: MXU operand dtype (bf16 default; pass None for f32 operands).
    Accumulation and the bias + hardsigmoid epilogue are always f32.
    """
    N, Cin, H, W = x.shape
    C2, _, KH, KW = weight.shape
    Cout = C2 // 2
    OH, OW = H - KH + 1, W - KW + 1
    OHW = OH * OW
    K = Cin * KH * KW

    if compute_dtype is not None:
        x_c = x.astype(compute_dtype)
        w_c = weight.astype(compute_dtype)
    else:
        x_c, w_c = x, weight

    # --- transposed im2col: P^T of shape (N, K, OH*OW), K ordered (kh, kw, cin) ---
    # Built from fusable slices + concat; allow_input_fusion lets XLA fuse this
    # producer into the Pallas operand instead of materializing it in HBM.
    cols = [
        x_c[:, :, kh:kh + OH, kw:kw + OW].reshape(N, Cin, OHW)
        for kh in range(KH) for kw in range(KW)
    ]
    pt = jnp.concatenate(cols, axis=1)                            # (N, K, OHW)

    # Fused weight: (2*Cout, Cin, KH, KW) -> (2*Cout, KH, KW, Cin) -> (2*Cout, K)
    # so its K axis matches the patch row ordering above.
    w_cat = w_c.transpose(0, 2, 3, 1).reshape(C2, K)
    b_cat = bias.reshape(C2, 1).astype(jnp.float32)

    in_itemsize = jnp.dtype(pt.dtype).itemsize
    out_itemsize = jnp.dtype(out_dtype).itemsize
    tm = _pick_spatial_tile(OHW, K, C2, N, in_itemsize)
    grid = (N, pl.cdiv(OHW, tm))

    cost = pl.CostEstimate(
        flops=2 * N * C2 * K * OHW,
        transcendentals=0,
        bytes_accessed=(N * K * OHW * in_itemsize          # patch stream (dominant)
                        + N * Cout * OHW * out_itemsize    # output writeback
                        + C2 * K * in_itemsize + C2 * 4),  # resident weights + bias
    )

    out = pl.pallas_call(
        gated_conv_kernel,
        out_shape=jax.ShapeDtypeStruct((N, Cout, OHW), out_dtype),
        grid=grid,
        in_specs=[
            pl.BlockSpec((None, K, tm), lambda n, m: (n, 0, m)),  # patches, tiled on lanes
            pl.BlockSpec((C2, K), lambda n, m: (0, 0)),           # fused weights (resident)
            pl.BlockSpec((C2, 1), lambda n, m: (0, 0)),           # fused bias    (resident)
        ],
        out_specs=pl.BlockSpec((None, Cout, tm), lambda n, m: (n, 0, m)),
        compiler_params=pltpu.CompilerParams(
            dimension_semantics=("parallel", "parallel"),
            allow_input_fusion=[True, False, False],   # fuse im2col producer into operand 0
            vmem_limit_bytes=32 << 20,
        ),
        cost_estimate=cost,
    )(pt, w_cat, b_cat)

    # (N, Cout, OH*OW) -> NCHW, pure reshape (no transpose, no de-pad slice).
    return out.reshape(N, Cout, OH, OW)


def reference_gated_conv2d(x, weight, bias):
    """Pure-JAX reference of the PyTorch module for verification."""
    y = jax.lax.conv_general_dilated(
        x, weight, window_strides=(1, 1), padding="VALID",
        dimension_numbers=("NCHW", "OIHW", "NCHW"),
    ) + bias.reshape(1, -1, 1, 1)
    C2 = weight.shape[0]
    a, m = y[:, : C2 // 2], y[:, C2 // 2:]
    return a * jnp.clip((m + 3.0) / 6.0, 0.0, 1.0)


if __name__ == "__main__":
    key = jax.random.PRNGKey(0)
    k_x, k_w, k_b = jax.random.split(key, 3)

    # Small shapes consistent with nn.Conv2d(in_channels=4, out_channels*2=16, kernel_size=3)
    N, Cin, H, W = 2, 4, 16, 16
    Cout, KH, KW = 8, 3, 3

    x = jax.random.normal(k_x, (N, Cin, H, W), dtype=jnp.float32)
    # Deterministic kaiming-uniform-like init (matches PyTorch Conv2d init bounds).
    fan_in = Cin * KH * KW
    bound = 1.0 / (fan_in ** 0.5)
    weight = jax.random.uniform(k_w, (2 * Cout, Cin, KH, KW), jnp.float32, -bound, bound)
    bias = jax.random.uniform(k_b, (2 * Cout,), jnp.float32, -bound, bound)

    ref = reference_gated_conv2d(x, weight, bias)

    # f32-operand path: tight numerical check.
    out_f32 = jax.block_until_ready(gated_conv2d(x, weight, bias, compute_dtype=None))
    assert out_f32.shape == (N, Cout, H - KH + 1, W - KW + 1), out_f32.shape
    assert jnp.allclose(out_f32, ref, atol=1e-5, rtol=1e-5), \
        float(jnp.max(jnp.abs(out_f32 - ref)))

    # Default bf16-operand path (f32 accumulation + f32 epilogue): loose check.
    out = jax.block_until_ready(gated_conv2d(x, weight, bias))
    assert out.shape == ref.shape, out.shape
    assert jnp.allclose(out, ref, atol=2e-2, rtol=2e-2), \
        float(jnp.max(jnp.abs(out - ref)))

    print("KERNEL_OK")
</pallas_src>

<mosaic_0001>
module attributes {stable_mosaic.version = 11 : i64} {
  func.func @gated_conv_kernel(%arg0: i32, %arg1: i32, %arg2: memref<1x36x196xf32, #tpu.memory_space<vmem>>, %arg3: memref<16x36xf32, #tpu.memory_space<vmem>>, %arg4: memref<16x1xf32, #tpu.memory_space<vmem>>, %arg5: memref<1x8x196xf32, #tpu.memory_space<vmem>>) attributes {dimension_semantics = [#tpu.dimension_semantics<parallel>, #tpu.dimension_semantics<parallel>], iteration_bounds = array<i64: 2, 1>, scalar_prefetch = 0 : i64, scratch_operands = 0 : i64, tpu.core_type = #tpu.core_type<tc>, window_params = [{transform_indices = @transform_0, window_bounds = array<i64: 1, 36, 196>}, {pipeline_mode = #tpu.pipeline_mode<synchronous>, transform_indices = @transform_1, window_bounds = array<i64: 16, 36>}, {pipeline_mode = #tpu.pipeline_mode<synchronous>, transform_indices = @transform_2, window_bounds = array<i64: 16, 1>}, {transform_indices = @transform_3, window_bounds = array<i64: 1, 8, 196>}]} {
    %c0 = arith.constant 0 : index
    %c0_0 = arith.constant 0 : index
    %0 = vector.load %arg3[%c0, %c0_0] : memref<16x36xf32, #tpu.memory_space<vmem>>, vector<16x36xf32>
    %c0_1 = arith.constant 0 : index
    %c0_2 = arith.constant 0 : index
    %c0_3 = arith.constant 0 : index
    %1 = vector.load %arg2[%c0_1, %c0_2, %c0_3] : memref<1x36x196xf32, #tpu.memory_space<vmem>>, vector<1x36x196xf32>
    %2 = vector.shape_cast %1 : vector<1x36x196xf32> to vector<36x196xf32>
    %cst = arith.constant dense<0.000000e+00> : vector<16x196xf32>
    %3 = tpu.matmul %0, %2, %cst {dimension_numbers = #tpu.dot_dimension_numbers<[1], [0], [0], [1], [0, 0, 1, 1], [], []>} : vector<16x36xf32>, vector<36x196xf32>, vector<16x196xf32> -> vector<16x196xf32>
    %c0_4 = arith.constant 0 : index
    %c0_5 = arith.constant 0 : index
    %4 = vector.load %arg4[%c0_4, %c0_5] : memref<16x1xf32, #tpu.memory_space<vmem>>, vector<16x1xf32>
    %5 = vector.broadcast %4 : vector<16x1xf32> to vector<16x196xf32>
    %6 = arith.addf %3, %5 : vector<16x196xf32>
    %7 = vector.extract_strided_slice %6 {offsets = [0, 0], sizes = [8, 196], strides = [1, 1]} : vector<16x196xf32> to vector<8x196xf32>
    %8 = vector.extract_strided_slice %6 {offsets = [8, 0], sizes = [8, 196], strides = [1, 1]} : vector<16x196xf32> to vector<8x196xf32>
    %cst_6 = arith.constant 0.166666672 : f32
    %9 = vector.broadcast %cst_6 : f32 to vector<8x196xf32>
    %10 = arith.mulf %8, %9 : vector<8x196xf32>
    %cst_7 = arith.constant 5.000000e-01 : f32
    %11 = vector.broadcast %cst_7 : f32 to vector<8x196xf32>
    %12 = arith.addf %10, %11 : vector<8x196xf32>
    %cst_8 = arith.constant 0.000000e+00 : f32
    %cst_9 = arith.constant 1.000000e+00 : f32
    %13 = vector.broadcast %cst_8 : f32 to vector<8x196xf32>
    %14 = arith.maximumf %13, %12 : vector<8x196xf32>
    %15 = vector.broadcast %cst_9 : f32 to vector<8x196xf32>
    %16 = arith.minimumf %15, %14 : vector<8x196xf32>
    %17 = arith.mulf %7, %16 : vector<8x196xf32>
    %c0_10 = arith.constant 0 : index
    %c0_11 = arith.constant 0 : index
    %c0_12 = arith.constant 0 : index
    %18 = vector.load %arg5[%c0_10, %c0_11, %c0_12] : memref<1x8x196xf32, #tpu.memory_space<vmem>>, vector<1x8x196xf32>
    %19 = vector.shape_cast %18 : vector<1x8x196xf32> to vector<8x196xf32>
    %20 = vector.shape_cast %17 : vector<8x196xf32> to vector<1x8x196xf32>
    tpu.vector_store %arg5[%c0_10, %c0_11, %c0_12], %20 {strides = array<i32>} : memref<1x8x196xf32, #tpu.memory_space<vmem>>, vector<1x8x196xf32>,
    return
  }
  func.func @transform_0(%arg0: i32, %arg1: i32) -> (i32, i32, i32) {
    %c0_i32 = arith.constant 0 : i32
    %c0_i32_0 = arith.constant 0 : i32
    return %arg0, %c0_i32, %arg1 : i32, i32, i32
  }
  func.func @transform_1(%arg0: i32, %arg1: i32) -> (i32, i32) {
    %c0_i32 = arith.constant 0 : i32
    %c0_i32_0 = arith.constant 0 : i32
    %c0_i32_1 = arith.constant 0 : i32
    return %c0_i32, %c0_i32_0 : i32, i32
  }
  func.func @transform_2(%arg0: i32, %arg1: i32) -> (i32, i32) {
    %c0_i32 = arith.constant 0 : i32
    %c0_i32_0 = arith.constant 0 : i32
    %c0_i32_1 = arith.constant 0 : i32
    return %c0_i32, %c0_i32_0 : i32, i32
  }
  func.func @transform_3(%arg0: i32, %arg1: i32) -> (i32, i32, i32) {
    %c0_i32 = arith.constant 0 : i32
    %c0_i32_0 = arith.constant 0 : i32
    return %arg0, %c0_i32, %arg1 : i32, i32, i32
  }
}

</mosaic_0001>

<llo_original>
// kernel: tpu_custom_call.1
$region0: #{tpu_custom_call.1}
  #allocation0 [shape = 'u32[]', space=smem, size = 0x4, offset = 0x4, fixed_abs, tag = 'smem constant byte address 0x4 - core index']
  #allocation1 [shape = 'u32[72,128]{1,0:T(1,128)}', space=vmem, size = 0x9000, scoped, tag = 'internal scratch']
  %s0 = inlined_call_operand.vmem [shape: f32[2,36,196], index: 0, kind: input, shape index: {}]
  %s1 = inlined_call_operand.vmem [shape: f32[16,36], index: 1, kind: input, shape index: {}]
  %s2 = inlined_call_operand.vmem [shape: f32[16,1], index: 2, kind: input, shape index: {}]
  %s3 = inlined_call_operand.hbm [shape: f32[2,8,196], index: 3, kind: output, shape index: {}]
  %s4 = sld [smem:[#allocation0]]
  $region45: #{tpu_custom_call.1} parent=0
    _
  %s6 = ssub.s32 1, %s4
  %s7 = scalar_select 0, %s6, %s4
  $region1: #{tpu_custom_call.1} parent=0
    #allocation2 [shape = 'u8[16384]{0}', space=vmem, size = 0x4000, scoped, tag = 'output window, operand 0']
    #allocation3 [shape = 's32[2]{0}', space=sflag, size = 0x8, scoped, tag = 'scoped memory for tpu_custom_call.1']
    %8 = vsyncpa [#allocation3], 0
    %s9 = scalar_lea.sflag [#allocation3], 1
    %10 = vsyncpa %s9, 0
    loop: start=0, step=1, limit=4
    $region2: #{tpu_custom_call.1} parent=1 // loop_pre_header
      _
    $region3: #{tpu_custom_call.1} parent=1 // loop_header
      %s12 = sphi 0, %s16
      %p13 = scmp.ge.s32.totalorder %s12, 4
      %s19 = sphi 0, %s31
      %s20 = sphi 0, %s27
      %s21 = sphi 0, %s19
      %s22 = sphi 0, %s20
      %s23 = sphi 0, %s21
      %s24 = sphi 0, %s22
      %s36 = sphi 0, %s38
      %s39 = sphi 0, %s36
      %s40 = sphi 0, %s39
      %s56 = sphi 0, %s40
      %s60 = sphi 0, %s60
      %s62 = sphi 0, %s60
      %s63 = sphi 0, %s62
      %s77 = sphi 0, %s63
      %s81 = sphi 0, %s81
      %s83 = sphi 0, %s81
      %s84 = sphi 0, %s83
      %s98 = sphi 0, %s84
      %s106 = sphi 0, %s108
      %s109 = sphi 0, %s106
      %s110 = sphi 0, %s109
      %s126 = sphi 0, %s110
    $region4: #{tpu_custom_call.1} parent=1 // loop_header_branch
      %15 = sbr.rel (%p13) target = $region8
    $region5: #{tpu_custom_call.1} parent=1 // loop_body
      %s17 = ssub.s32 %s12, 1
      %s18 = ssub.s32 %s12, 2
      %s25 = sadd.s32 1, %s20
      %p26 = scmp.ge.s32.totalorder %s25, 1
      %s27 = scalar_select %p26, 0, %s25
      %s28 = sadd.s32 1, %s19
      %s29 = scalar_select %p26, %s28, %s19
      %p30 = scmp.ge.s32.totalorder %s29, 2
      %s31 = scalar_select %p30, 0, %s29
      %s32 = ssub.s32 %s19, %s31
      %s33 = ssub.s32 %s20, %s27
      %s34 = sor.u32 %s32, %s33
      %p35 = scmp.eq.s32.totalorder %s34, 0
      %s37 = sadd.s32 %s36, 1
      %s38 = scalar_select %p35, %s36, %s37
      %p41 = pneg %p35
      %p42 = scmp.eq.s32.totalorder %s12, 1
      %p43 = por %p41, %p42
      %p44 = scmp.ne.s32.totalorder %s36, %s39
      %p45 = scmp.eq.s32.totalorder %s12, 0
      %p46 = por %p44, %p45
      %p47 = scmp.ne.s32.totalorder %s36, %s39
      %p48 = scmp.eq.s32.totalorder %s17, 1
      %p49 = por %p47, %p48
      %p50 = scmp.ne.s32.totalorder %s39, %s40
      %p51 = scmp.eq.s32.totalorder %s17, 0
      %p52 = por %p50, %p51
      %p53 = scmp.ne.s32.totalorder %s39, %s40
      %p54 = scmp.eq.s32.totalorder %s18, 1
      %p55 = por %p53, %p54
      %p57 = scmp.ne.s32.totalorder %s40, %s56
      %p58 = scmp.eq.s32.totalorder %s18, 0
      %p59 = por %p57, %p58
      %s61 = sadd.s32 %s60, 1
      %p64 = scmp.eq.s32.totalorder %s12, 1
      %p65 = scmp.ne.s32.totalorder %s60, %s62
      %p66 = scmp.eq.s32.totalorder %s12, 0
      %p67 = por %p65, %p66
      %p68 = scmp.ne.s32.totalorder %s60, %s62
      %p69 = scmp.eq.s32.totalorder %s17, 1
      %p70 = por %p68, %p69
      %p71 = scmp.ne.s32.totalorder %s62, %s63
      %p72 = scmp.eq.s32.totalorder %s17, 0
      %p73 = por %p71, %p72
      %p74 = scmp.ne.s32.totalorder %s62, %s63
      %p75 = scmp.eq.s32.totalorder %s18, 1
      %p76 = por %p74, %p75
      %p78 = scmp.ne.s32.totalorder %s63, %s77
      %p79 = scmp.eq.s32.totalorder %s18, 0
      %p80 = por %p78, %p79
      %s82 = sadd.s32 %s81, 1
      %p85 = scmp.eq.s32.totalorder %s12, 1
      %p86 = scmp.ne.s32.totalorder %s81, %s83
      %p87 = scmp.eq.s32.totalorder %s12, 0
      %p88 = por %p86, %p87
      %p89 = scmp.ne.s32.totalorder %s81, %s83
      %p90 = scmp.eq.s32.totalorder %s17, 1
      %p91 = por %p89, %p90
      %p92 = scmp.ne.s32.totalorder %s83, %s84
      %p93 = scmp.eq.s32.totalorder %s17, 0
      %p94 = por %p92, %p93
      %p95 = scmp.ne.s32.totalorder %s83, %s84
      %p96 = scmp.eq.s32.totalorder %s18, 1
      %p97 = por %p95, %p96
      %p99 = scmp.ne.s32.totalorder %s84, %s98
      %p100 = scmp.eq.s32.totalorder %s18, 0
      %p101 = por %p99, %p100
      %s102 = ssub.s32 %s19, %s31
      %s103 = ssub.s32 %s20, %s27
      %s104 = sor.u32 %s102, %s103
      %p105 = scmp.eq.s32.totalorder %s104, 0
      %s107 = sadd.s32 %s106, 1
      %s108 = scalar_select %p105, %s106, %s107
      %p111 = pneg %p105
      %p112 = scmp.eq.s32.totalorder %s12, 1
      %p113 = por %p111, %p112
      %p114 = scmp.ne.s32.totalorder %s106, %s109
      %p115 = scmp.eq.s32.totalorder %s12, 0
      %p116 = por %p114, %p115
      %p117 = scmp.ne.s32.totalorder %s106, %s109
      %p118 = scmp.eq.s32.totalorder %s17, 1
      %p119 = por %p117, %p118
      %p120 = scmp.ne.s32.totalorder %s109, %s110
      %p121 = scmp.eq.s32.totalorder %s17, 0
      %p122 = por %p120, %p121
      %p123 = scmp.ne.s32.totalorder %s109, %s110
      %p124 = scmp.eq.s32.totalorder %s18, 1
      %p125 = por %p123, %p124
      %p127 = scmp.ne.s32.totalorder %s110, %s126
      %p128 = scmp.eq.s32.totalorder %s18, 0
      %p129 = por %p127, %p128
      %p130 = scmp.le.s32.totalorder 1, %s12
      %p131 = scmp.lt.s32.totalorder %s12, 3
      %p132 = pnand %p130, %p131
      %p133 = pneg %p132
      // Predicated region
      $region9: #{tpu_custom_call.1} parent=5 // pred_check
        _
      $region10: #{tpu_custom_call.1} parent=5 // pred_check_branch
        %135 = sbr.rel (%p132) target = $region12
      $region11: #{tpu_custom_call.1} parent=5 // pred_region
        %s136 = ssub.s32 %s12, 1
        // Predicated region
        $region13: #{tpu_custom_call.1} parent=11 // pred_check
          %p137 = pneg %p73
        $region14: #{tpu_custom_call.1} parent=11 // pred_check_branch
          %139 = sbr.rel (%p137) target = $region16
        $region15: #{tpu_custom_call.1} parent=11 // pred_region
          _
        $region16: #{tpu_custom_call.1} parent=11 // pred_fallthru
          _
        // Predicated region
        $region17: #{tpu_custom_call.1} parent=11 // pred_check
          %p140 = pneg %p94
        $region18: #{tpu_custom_call.1} parent=11 // pred_check_branch
          %142 = sbr.rel (%p140) target = $region20
        $region19: #{tpu_custom_call.1} parent=11 // pred_region
          _
        $region20: #{tpu_custom_call.1} parent=11 // pred_fallthru
          _
      $region12: #{tpu_custom_call.1} parent=5 // pred_fallthru
        _
      %p143 = scmp.lt.s32.totalorder %s12, 2
      // Predicated region
      $region21: #{tpu_custom_call.1} parent=5 // pred_check
        %p144 = pneg %p143
      $region22: #{tpu_custom_call.1} parent=5 // pred_check_branch
        %146 = sbr.rel (%p144) target = $region24
      $region23: #{tpu_custom_call.1} parent=5 // pred_region
        // Predicated region
        $region25: #{tpu_custom_call.1} parent=23 // pred_check
          %p147 = pneg %p46
        $region26: #{tpu_custom_call.1} parent=23 // pred_check_branch
          %149 = sbr.rel (%p147) target = $region28
        $region27: #{tpu_custom_call.1} parent=23 // pred_region
          %s150 = smul.u32 2, %s20
          %p151 = scmp.lt.s32.totalorder %s19, 1
          %s152 = scalar_select %p151, %s19, 1
          %p153 = scmp.lt.s32.totalorder %s150, 1
          %s154 = scalar_select %p153, %s150, 1
          %s155 = smul.addr %s152, 10
          %s156 = sadd.s32 %s154, %s155
          %s157 = smul.addr %s156, 8
          %s158 = scalar_lea.vmem %s0, %s157
          %s159 = smul.u32 2, %s20
        $region28: #{tpu_custom_call.1} parent=23 // pred_fallthru
          _
      $region24: #{tpu_custom_call.1} parent=5 // pred_fallthru
        _
      %p160 = scmp.le.s32.totalorder 1, %s12
      %p161 = scmp.lt.s32.totalorder %s12, 3
      %p162 = pnand %p160, %p161
      %p163 = pneg %p162
      // Predicated region
      $region29: #{tpu_custom_call.1} parent=5 // pred_check
        _
      $region30: #{tpu_custom_call.1} parent=5 // pred_check_branch
        %165 = sbr.rel (%p162) target = $region32
      $region31: #{tpu_custom_call.1} parent=5 // pred_region
        %s166 = ssub.s32 %s12, 1
        %s167 = smul.u32 2, %s22
        %p168 = scmp.lt.s32.totalorder %s21, 1
        %s169 = scalar_select %p168, %s21, 1
        %p170 = scmp.lt.s32.totalorder %s167, 1
        %s171 = scalar_select %p170, %s167, 1
        %s172 = smul.addr %s169, 10
        %s173 = sadd.s32 %s171, %s172
        %s174 = smul.addr %s173, 8
        %s175 = scalar_lea.vmem %s0, %s174
        %p176 = pneg %p52
        %p177 = pneg %p49
        %p178 = pneg %p73
        %p179 = pneg %p70
        %p180 = pneg %p94
        %p181 = pneg %p91
        %p182 = pneg %p122
        %p183 = pneg %p119
        %s184 = sand.u32 %s109, 1
        %s185 = scalar_lea.sflag [#allocation3], %s184
        %s186 = sand.u32 %s109, 1
        %s187 = smul.addr %s186, 16
        %s188 = scalar_lea.vmem [#allocation2], %s187
        %s189 = smul.u32 2, %s22
        %p190 = scmp.lt.s32.totalorder %s21, 1
        %s191 = scalar_select %p190, %s21, 1
        %p192 = scmp.lt.s32.totalorder %s189, 1
        %s193 = scalar_select %p192, %s189, 1
        %s194 = smul.addr %s191, 10
        %s195 = sadd.s32 %s193, %s194
        %s196 = smul.addr %s195, 8
        %s197 = scalar_lea.vmem %s0, %s196
        %s198 = smul.u32 2, %s22
        %s199 = smul.u32 2, %s22
        %v200 = vld [vmem:[%s1] sm:$0xff]
        %v201 = vld [vmem:[%s1 + $0x8] sm:$0xff]
        %v202 = vld [vmem:[%s197] sm:$0xff]
        %v203 = vld [vmem:[%s197 + $0x8] sm:$0xff]
        %v204 = vld [vmem:[%s197 + $0x10] sm:$0xff]
        %v205 = vld [vmem:[%s197 + $0x18] sm:$0xff]
        %v206 = vld [vmem:[%s197 + $0x20] sm:$0xff]
        %v207 = vld [vmem:[%s197 + $0x28] sm:$0xff]
        %v208 = vld [vmem:[%s197 + $0x30] sm:$0xff]
        %v209 = vld [vmem:[%s197 + $0x38] sm:$0xff]
        %v210 = vld [vmem:[%s197 + $0x40] sm:$0xf]
        %v211 = vld [vmem:[%s197 + $0x48] sm:$0xf]
        %v212 = vld [vmem:[%s2] sm:$0xff]
        %v213 = vld [vmem:[%s2 + $0x8] sm:$0xff]
        %215 = vset.pattern.permute.xlu0 0
        %216 = vperm.xlu0 %215, %v212
        %v217 = vpop.permute.xlu0 %216
        %220 = vset.pattern.permute.xlu0 0
        %221 = vperm.xlu0 %220, %v213
        %v222 = vpop.permute.xlu0 %221
        %vm224 = vcmask 293888
        %v226 = vsel %vm224, %v200, 0
        %v229 = vsel %vm224, %v201, 0
        %vm231 = vcmask 1043456
        %v233 = vsel %vm231, %v210, 0
        %v236 = vsel %vm231, %v211, 0
        %238 = vmatpush.msra.mxu0 0.0
        %239 = vmatpush.msra.mxu0 0.0
        %240 = vmatpush.msra.mxu0 0.0
        %241 = vmatpush.msra.mxu0 0.0
        %242 = vmatpush.msra.mxu0 0.0
        %243 = vmatpush.msra.mxu0 0.0
        %244 = vmatpush.msra.mxu0 0.0
        %245 = vmatpush.msra.mxu0 0.0
        %246 = vmatpush.msra.mxu0 0.0
        %247 = vmatpush.msra.mxu0 0.0
        %248 = vmatpush.msra.mxu0 0.0
        %249 = vmatpush.msra.mxu0 %v233
        %250 = vmatpush.msra.mxu0 %v208
        %251 = vmatpush.msra.mxu0 %v206
        %252 = vmatpush.msra.mxu0 %v204
        %253 = vmatpush.msra.mxu0 %v202
        %254 = vmatmul.f32.gmra.mxu0 %v226
        %v255 = vpop.f32.mrf.mxu0
        %v256 = vadd.f32 %v217, %v255
        %257 = vmatmul.f32.gmra.mxu0 %v229
        %v258 = vpop.f32.mrf.mxu0
        %v259 = vadd.f32 %v222, %v258
        %260 = vdwg.mxu0
        %261 = vmatpush.msra.mxu0 0.0
        %262 = vmatpush.msra.mxu0 0.0
        %263 = vmatpush.msra.mxu0 0.0
        %264 = vmatpush.msra.mxu0 0.0
        %265 = vmatpush.msra.mxu0 0.0
        %266 = vmatpush.msra.mxu0 0.0
        %267 = vmatpush.msra.mxu0 0.0
        %268 = vmatpush.msra.mxu0 0.0
        %269 = vmatpush.msra.mxu0 0.0
        %270 = vmatpush.msra.mxu0 0.0
        %271 = vmatpush.msra.mxu0 0.0
        %272 = vmatpush.msra.mxu0 %v236
        %273 = vmatpush.msra.mxu0 %v209
        %274 = vmatpush.msra.mxu0 %v207
        %275 = vmatpush.msra.mxu0 %v205
        %276 = vmatpush.msra.mxu0 %v203
        %277 = vmatmul.f32.gmra.mxu0 %v226
        %v278 = vpop.f32.mrf.mxu0
        %v279 = vadd.f32 %v217, %v278
        %280 = vmatmul.f32.gmra.mxu0 %v229
        %v281 = vpop.f32.mrf.mxu0
        %v282 = vadd.f32 %v222, %v281
        %283 = vdwg.mxu0
        %v284 = vmul.f32 %v259, 0.16666667
        %v285 = vmul.f32 %v282, 0.16666667
        %v286 = vadd.f32 %v284, 0.5
        %v287 = vadd.f32 %v285, 0.5
        %v288 = vmax.f32 %v286, 0.0
        %v289 = vmax.f32 %v287, 0.0
        %v290 = vmin.f32 %v288, 1.0
        %v291 = vmin.f32 %v289, 1.0
        %v292 = vmul.f32 %v256, %v290
        %v293 = vmul.f32 %v279, %v291
        %294 = vst [vmem:[%s188] sm:$0xff] %v292
        %vm295 = vcmask 556032
        %296 = vst.msk [vmem:[%s188 + $0x8] sm:$0xff] %vm295, %v293
        %s297 = sand.u32 %s109, 1
        %s298 = scalar_lea.sflag [#allocation3], %s297
        %s299 = sand.u32 %s109, 1
        %s300 = smul.addr %s299, 16
        %s301 = scalar_lea.vmem [#allocation2], %s300
        // Predicated region
        $region33: #{tpu_custom_call.1} parent=31 // pred_check
          %p302 = pneg %p119
        $region34: #{tpu_custom_call.1} parent=31 // pred_check_branch
          %304 = sbr.rel (%p302) target = $region36
        $region35: #{tpu_custom_call.1} parent=31 // pred_region
          %s305 = smul.u32 2, %s22
          %307 = vsyncadd %s298, 0
          %s308 = smul.addr %s21, 2
          %s309 = sadd.s32 %s305, %s308
          %s310 = smul.addr %s309, 8
          %s311 = scalar_lea.hbm %s3, %s310
          %s313 = sshll.u32 %s301, 4
          %s314 = int_to_ptr.vmem [resolvable:$true] %s313
          %s315 = sshll.u32 %s311, 4
          %s316 = int_to_ptr.hbm [resolvable:$true] %s315
          %318 = dma.vmem_to_hbm [thread:$0]  %s314, 256, %s316, %s298
        $region36: #{tpu_custom_call.1} parent=31 // pred_fallthru
          _
      $region32: #{tpu_custom_call.1} parent=5 // pred_fallthru
        _
      %p319 = scmp.le.s32.totalorder 2, %s12
      // Predicated region
      $region37: #{tpu_custom_call.1} parent=5 // pred_check
        %p320 = pneg %p319
      $region38: #{tpu_custom_call.1} parent=5 // pred_check_branch
        %322 = sbr.rel (%p320) target = $region40
      $region39: #{tpu_custom_call.1} parent=5 // pred_region
        %s323 = ssub.s32 %s12, 2
        // Predicated region
        $region41: #{tpu_custom_call.1} parent=39 // pred_check
          %p324 = pneg %p125
        $region42: #{tpu_custom_call.1} parent=39 // pred_check_branch
          %326 = sbr.rel (%p324) target = $region44
        $region43: #{tpu_custom_call.1} parent=39 // pred_region
          %s327 = sand.u32 %s110, 1
          %s328 = scalar_lea.sflag [#allocation3], %s327
          %s329 = sand.u32 %s110, 1
          %s330 = smul.addr %s329, 16
          %s331 = scalar_lea.vmem [#allocation2], %s330
          %333 = dma.done %s328, 256
        $region44: #{tpu_custom_call.1} parent=39 // pred_fallthru
          _
      $region40: #{tpu_custom_call.1} parent=5 // pred_fallthru
        _
    $region6: #{tpu_custom_call.1} parent=1 // loop_footer
      %s16 = sadd.s32 1, %s12
    $region7: #{tpu_custom_call.1} parent=1 // loop_footer_branch
      %11 = sbr.rel target = $region3
    $region8: #{tpu_custom_call.1} parent=1 // loop_exit
      _
    %334 = vsyncpa [#allocation3], 1
    %s335 = scalar_lea.sflag [#allocation3], 1
    %336 = vsyncpa %s335, 1

</llo_original>
